<compile_context>
chip_gen: v5e
topology: v5e:2x2
jax: 0.10.0
libtpu: 0.0.40
codegen_flags: <defaults>
</compile_context>

<pallas_src>
import jax
import jax.numpy as jnp
from jax import lax
from jax.experimental import pallas as pl
from jax.experimental.pallas import tpu as pltpu


# TODO(synk): BaseModel.forward(coord, atype, natoms, mapping, shift, selected, box)
# raises NotImplementedError in the reference module; there is no forward compute
# to translate. The stat-computation hot paths are implemented instead.


def _round_up(x, m):
    return ((x + m - 1) // m) * m


# ----------------------------------------------------------------------------
# Kernel 1: Gram matrix of the augmented design matrix [A | y] for
# compute_output_stats.  G = [A|y]^T [A|y]  ->  A^T A and A^T y are slices.
# Output stays resident in VMEM across the (reduction) grid axis.
# ----------------------------------------------------------------------------
def _gram_kernel(a_ref, g_ref):
    @pl.when(pl.program_id(0) == 0)
    def _init():
        g_ref[...] = jnp.zeros_like(g_ref)

    a = a_ref[...]                                      # (tile_frames, p)
    # Contract over axis 0 of both operands: no explicit transpose of `a`.
    g_ref[...] += lax.dot_general(
        a, a,
        dimension_numbers=(((0,), (0,)), ((), ())),
        preferred_element_type=jnp.float32,
    )


def _gram(a_aug, max_block_bytes=4 * 1024 * 1024):
    """Return [A|y]^T [A|y] accumulated over frame tiles."""
    n, p = a_aug.shape
    # Largest tile that keeps a double-buffered input block <= max_block_bytes.
    tile_cap = max(8, (max_block_bytes // (p * 4)) // 8 * 8)
    tile = min(_round_up(n, 8), tile_cap)
    n_pad = _round_up(n, tile)
    if n_pad != n:                                     # zero rows are neutral
        a_aug = jnp.pad(a_aug, ((0, n_pad - n), (0, 0)))
    grid = (n_pad // tile,)

    gram = pl.pallas_call(
        _gram_kernel,
        out_shape=jax.ShapeDtypeStruct((p, p), jnp.float32),
        grid_spec=pltpu.PrefetchScalarGridSpec(
            num_scalar_prefetch=0,
            grid=grid,
            in_specs=[pl.BlockSpec((tile, p), lambda i: (i, 0))],
            out_specs=pl.BlockSpec((p, p), lambda i: (0, 0)),
        ),
        compiler_params=pltpu.CompilerParams(
            dimension_semantics=("arbitrary",),
            vmem_limit_bytes=32 * 1024 * 1024,
        ),
    )(a_aug)
    return gram


def compute_output_stats(energy, natoms_mat):
    """Least-squares per-type energy bias, like deepmd compute_output_stats.

    Returns tmp of shape [ntypes, 1]; bias_atom_e = tmp[:, 0].
    """
    natoms_mat = natoms_mat.astype(jnp.float32)
    energy = energy.astype(jnp.float32)
    ntypes = natoms_mat.shape[1]
    a_aug = jnp.concatenate([natoms_mat, energy], axis=1)   # (nframes, ntypes+1)
    gram = _gram(a_aug)                                     # (ntypes+1, ntypes+1)
    ata = gram[:ntypes, :ntypes]
    aty = gram[:ntypes, ntypes:ntypes + 1]
    # tiny ridge for numerical stability of the normal-equation solve
    tmp = jnp.linalg.solve(ata + 1e-6 * jnp.eye(ntypes, dtype=jnp.float32), aty)
    return tmp                                              # [ntypes, 1]


# ----------------------------------------------------------------------------
# Kernel 2: descriptor input stats (compute_input_stats analogue)
#   per-column sum and sum-of-squares of the env matrix, reduced over samples.
#   Grid: (num_splits [parallel], steps [arbitrary]).  Each split writes its
#   own (2, D) partial block; partials are summed in JAX afterwards.
# ----------------------------------------------------------------------------
def _moments_kernel(x_ref, out_ref, acc_s, acc_s2):
    @pl.when(pl.program_id(1) == 0)
    def _init():
        acc_s[...] = jnp.zeros_like(acc_s)
        acc_s2[...] = jnp.zeros_like(acc_s2)

    x = x_ref[...]                                   # (tile_n, D)
    tile_n, d = x.shape
    # Keep per-step accumulation sublane-dense: reduce groups of 8 rows into
    # an (8, D) scratch with plain VALU adds; no cross-sublane XLU work here.
    xg = x.reshape(tile_n // 8, 8, d)
    acc_s[...] += jnp.sum(xg, axis=0)
    acc_s2[...] += jnp.sum(xg * xg, axis=0)

    @pl.when(pl.program_id(1) == pl.num_programs(1) - 1)
    def _finalize():
        # single cross-sublane reduce, once per split
        s = jnp.sum(acc_s[...], axis=0, keepdims=True)      # (1, D)
        s2 = jnp.sum(acc_s2[...], axis=0, keepdims=True)    # (1, D)
        out_ref[0] = jnp.concatenate([s, s2], axis=0)       # (2, D), lane-dense


def _column_moments(env_mat, num_splits=2, max_block_bytes=4 * 1024 * 1024):
    n, d = env_mat.shape
    env_mat = env_mat.astype(jnp.float32)

    per_split = -(-n // num_splits)
    # Largest tile whose double-buffered input stream stays comfortably inside
    # VMEM on every generation (<= ~8 MiB in flight for the default 4 MiB cap).
    tile_cap = max(8, (max_block_bytes // (d * 4)) // 8 * 8)
    tile_n = min(_round_up(per_split, 8), tile_cap)
    steps = -(-per_split // tile_n)
    n_pad = num_splits * steps * tile_n
    if n_pad != n:                                     # zero rows are neutral
        env_mat = jnp.pad(env_mat, ((0, n_pad - n), (0, 0)))

    out = pl.pallas_call(
        _moments_kernel,
        out_shape=jax.ShapeDtypeStruct((num_splits, 2, d), jnp.float32),
        grid_spec=pltpu.PrefetchScalarGridSpec(
            num_scalar_prefetch=0,
            grid=(num_splits, steps),
            in_specs=[pl.BlockSpec((tile_n, d),
                                   lambda c, i: (c * steps + i, 0))],
            out_specs=pl.BlockSpec((1, 2, d), lambda c, i: (c, 0, 0)),
            scratch_shapes=[
                pltpu.VMEM((8, d), jnp.float32),
                pltpu.VMEM((8, d), jnp.float32),
            ],
        ),
        compiler_params=pltpu.CompilerParams(
            dimension_semantics=("parallel", "arbitrary"),
            vmem_limit_bytes=32 * 1024 * 1024,
        ),
    )(env_mat)

    col_sum = jnp.sum(out[:, 0, :], axis=0, keepdims=True)     # (1, D)
    col_sumsq = jnp.sum(out[:, 1, :], axis=0, keepdims=True)   # (1, D)
    return col_sum, col_sumsq


def compute_input_stats(env_mat, nnei):
    """sumr, suma, sumn, sumr2, suma2 from an env matrix [nsamples, nnei*4]."""
    nsamples = env_mat.shape[0]
    col_sum, col_sumsq = _column_moments(env_mat)
    col_sum = col_sum.reshape(nnei, 4)
    col_sumsq = col_sumsq.reshape(nnei, 4)
    sumr = jnp.sum(col_sum[:, 0])                # radial component (col 0)
    suma = jnp.sum(col_sum[:, 1:4])              # angular components (cols 1..3)
    sumr2 = jnp.sum(col_sumsq[:, 0])
    suma2 = jnp.sum(col_sumsq[:, 1:4])
    # TODO(synk): deepmd's compute_input_stats returns per-type counts; a
    # single total-sample count is returned here, matching the synthetic setup.
    sumn = jnp.float32(nsamples)
    return sumr, suma, sumn, sumr2, suma2


# ----------------------------------------------------------------------------
# Driver: emulates BaseModel.compute_or_load_stat numerical path
# (resuming=False, sampled is not None), with deterministic synthetic data.
# ----------------------------------------------------------------------------
def compute_or_load_stat(energy, natoms_mat, env_mat, nnei):
    sumr, suma, sumn, sumr2, suma2 = compute_input_stats(env_mat, nnei)
    tmp = compute_output_stats(energy, natoms_mat)
    bias_atom_e = tmp[:, 0]
    return {
        "sumr": sumr, "suma": suma, "sumn": sumn,
        "sumr2": sumr2, "suma2": suma2,
        "bias_atom_e": bias_atom_e,
    }


if __name__ == "__main__":
    key = jax.random.PRNGKey(0)
    k1, k2, k3, k4 = jax.random.split(key, 4)

    nframes, ntypes = 128, 8
    nsamples, nnei = 256, 32          # env_mat feature dim = nnei * 4 = 128

    # synthetic per-frame atom counts (>=1) and energies built from a known bias
    natoms_mat = jnp.floor(
        jax.random.uniform(k1, (nframes, ntypes), minval=1.0, maxval=10.0)
    ).astype(jnp.float32)
    true_bias = jax.random.normal(k2, (ntypes, 1), dtype=jnp.float32)
    energy = natoms_mat @ true_bias + 0.01 * jax.random.normal(
        k3, (nframes, 1), dtype=jnp.float32
    )
    env_mat = jax.random.normal(k4, (nsamples, nnei * 4), dtype=jnp.float32)

    stats = compute_or_load_stat(energy, natoms_mat, env_mat, nnei)
    jax.block_until_ready(stats)

    # sanity check against pure-JAX references
    ref_bias = jnp.linalg.lstsq(natoms_mat, energy)[0][:, 0]
    assert jnp.allclose(stats["bias_atom_e"], ref_bias, atol=1e-2), "bias mismatch"
    ref_sumr = jnp.sum(env_mat.reshape(nsamples, nnei, 4)[..., 0])
    assert jnp.allclose(stats["sumr"], ref_sumr, rtol=1e-4), "sumr mismatch"
    ref_suma2 = jnp.sum(env_mat.reshape(nsamples, nnei, 4)[..., 1:4] ** 2)
    assert jnp.allclose(stats["suma2"], ref_suma2, rtol=1e-4), "suma2 mismatch"

    print("KERNEL_OK")
</pallas_src>

<mosaic_0001>
module attributes {stable_mosaic.version = 11 : i64} {
  func.func @_moments_kernel(%arg0: i32, %arg1: i32, %arg2: memref<128x128xf32, #tpu.memory_space<vmem>>, %arg3: memref<1x2x128xf32, #tpu.memory_space<vmem>>, %arg4: memref<8x128xf32, #tpu.memory_space<vmem>>, %arg5: memref<8x128xf32, #tpu.memory_space<vmem>>) attributes {dimension_semantics = [#tpu.dimension_semantics<parallel>, #tpu.dimension_semantics<arbitrary>], iteration_bounds = array<i64: 2, 1>, scalar_prefetch = 0 : i64, scratch_operands = 2 : i64, tpu.core_type = #tpu.core_type<tc>, window_params = [{transform_indices = @transform_0, window_bounds = array<i64: 128, 128>}, {transform_indices = @transform_1, window_bounds = array<i64: 1, 2, 128>}]} {
    %c0_i32 = arith.constant 0 : i32
    %0 = arith.cmpi eq, %arg1, %c0_i32 : i32
    %1 = arith.extui %0 : i1 to i32
    %c0_i32_0 = arith.constant 0 : i32
    %2 = arith.cmpi ne, %1, %c0_i32_0 : i32
    scf.if %2 {
      %cst_13 = arith.constant 0.000000e+00 : f32
      %17 = vector.broadcast %cst_13 : f32 to vector<8x128xf32>
      %c0_14 = arith.constant 0 : index
      %c0_15 = arith.constant 0 : index
      %18 = vector.load %arg4[%c0_14, %c0_15] : memref<8x128xf32, #tpu.memory_space<vmem>>, vector<8x128xf32>
      tpu.vector_store %arg4[%c0_14, %c0_15], %17 {strides = array<i32>} : memref<8x128xf32, #tpu.memory_space<vmem>>, vector<8x128xf32>,
      %cst_16 = arith.constant 0.000000e+00 : f32
      %19 = vector.broadcast %cst_16 : f32 to vector<8x128xf32>
      %c0_17 = arith.constant 0 : index
      %c0_18 = arith.constant 0 : index
      %20 = vector.load %arg5[%c0_17, %c0_18] : memref<8x128xf32, #tpu.memory_space<vmem>>, vector<8x128xf32>
      tpu.vector_store %arg5[%c0_17, %c0_18], %19 {strides = array<i32>} : memref<8x128xf32, #tpu.memory_space<vmem>>, vector<8x128xf32>,
    } else {
    }
    %c0 = arith.constant 0 : index
    %c0_1 = arith.constant 0 : index
    %3 = vector.load %arg2[%c0, %c0_1] : memref<128x128xf32, #tpu.memory_space<vmem>>, vector<128x128xf32>
    %4 = vector.shape_cast %3 : vector<128x128xf32> to vector<16x8x128xf32>
    %c0_2 = arith.constant 0 : index
    %c0_3 = arith.constant 0 : index
    %5 = vector.load %arg4[%c0_2, %c0_3] : memref<8x128xf32, #tpu.memory_space<vmem>>, vector<8x128xf32>
    %cst = arith.constant dense<0.000000e+00> : vector<8x128xf32>
    %6 = vector.multi_reduction <add>, %4, %cst [0] : vector<16x8x128xf32> to vector<8x128xf32>
    %7 = arith.addf %5, %6 : vector<8x128xf32>
    %c0_4 = arith.constant 0 : index
    %c0_5 = arith.constant 0 : index
    %8 = vector.load %arg4[%c0_4, %c0_5] : memref<8x128xf32, #tpu.memory_space<vmem>>, vector<8x128xf32>
    tpu.vector_store %arg4[%c0_4, %c0_5], %7 {strides = array<i32>} : memref<8x128xf32, #tpu.memory_space<vmem>>, vector<8x128xf32>,
    %c0_6 = arith.constant 0 : index
    %c0_7 = arith.constant 0 : index
    %9 = vector.load %arg5[%c0_6, %c0_7] : memref<8x128xf32, #tpu.memory_space<vmem>>, vector<8x128xf32>
    %10 = arith.mulf %4, %4 : vector<16x8x128xf32>
    %cst_8 = arith.constant dense<0.000000e+00> : vector<8x128xf32>
    %11 = vector.multi_reduction <add>, %10, %cst_8 [0] : vector<16x8x128xf32> to vector<8x128xf32>
    %12 = arith.addf %9, %11 : vector<8x128xf32>
    %c0_9 = arith.constant 0 : index
    %c0_10 = arith.constant 0 : index
    %13 = vector.load %arg5[%c0_9, %c0_10] : memref<8x128xf32, #tpu.memory_space<vmem>>, vector<8x128xf32>
    tpu.vector_store %arg5[%c0_9, %c0_10], %12 {strides = array<i32>} : memref<8x128xf32, #tpu.memory_space<vmem>>, vector<8x128xf32>,
    %c0_i32_11 = arith.constant 0 : i32
    %14 = arith.cmpi eq, %arg1, %c0_i32_11 : i32
    %15 = arith.extui %14 : i1 to i32
    %c0_i32_12 = arith.constant 0 : i32
    %16 = arith.cmpi ne, %15, %c0_i32_12 : i32
    scf.if %16 {
      %c0_13 = arith.constant 0 : index
      %c0_14 = arith.constant 0 : index
      %17 = vector.load %arg4[%c0_13, %c0_14] : memref<8x128xf32, #tpu.memory_space<vmem>>, vector<8x128xf32>
      %cst_15 = arith.constant dense<0.000000e+00> : vector<128xf32>
      %18 = vector.multi_reduction <add>, %17, %cst_15 [0] : vector<8x128xf32> to vector<128xf32>
      %19 = vector.shape_cast %18 : vector<128xf32> to vector<1x128xf32>
      %c0_16 = arith.constant 0 : index
      %c0_17 = arith.constant 0 : index
      %20 = vector.load %arg5[%c0_16, %c0_17] : memref<8x128xf32, #tpu.memory_space<vmem>>, vector<8x128xf32>
      %cst_18 = arith.constant dense<0.000000e+00> : vector<128xf32>
      %21 = vector.multi_reduction <add>, %20, %cst_18 [0] : vector<8x128xf32> to vector<128xf32>
      %22 = vector.shape_cast %21 : vector<128xf32> to vector<1x128xf32>
      %23 = tpu.concatenate %19, %22 in 0 : vector<1x128xf32>, vector<1x128xf32> -> vector<2x128xf32>
      %c0_19 = arith.constant 0 : index
      %c0_20 = arith.constant 0 : index
      %c0_21 = arith.constant 0 : index
      %24 = vector.load %arg3[%c0_19, %c0_20, %c0_21] : memref<1x2x128xf32, #tpu.memory_space<vmem>>, vector<1x2x128xf32>
      %25 = vector.shape_cast %24 : vector<1x2x128xf32> to vector<2x128xf32>
      %26 = vector.shape_cast %23 : vector<2x128xf32> to vector<1x2x128xf32>
      tpu.vector_store %arg3[%c0_19, %c0_20, %c0_21], %26 {strides = array<i32>} : memref<1x2x128xf32, #tpu.memory_space<vmem>>, vector<1x2x128xf32>,
    } else {
    }
    return
  }
  func.func @transform_0(%arg0: i32, %arg1: i32) -> (i32, i32) {
    %c1_i32 = arith.constant 1 : i32
    %0 = arith.muli %arg0, %c1_i32 : i32
    %1 = arith.addi %0, %arg1 : i32
    %c0_i32 = arith.constant 0 : i32
    %c0_i32_0 = arith.constant 0 : i32
    return %1, %c0_i32 : i32, i32
  }
  func.func @transform_1(%arg0: i32, %arg1: i32) -> (i32, i32, i32) {
    %c0_i32 = arith.constant 0 : i32
    %c0_i32_0 = arith.constant 0 : i32
    %c0_i32_1 = arith.constant 0 : i32
    return %arg0, %c0_i32, %c0_i32_0 : i32, i32, i32
  }
}

</mosaic_0001>

<llo_original>
// kernel: tpu_custom_call.1
$region0: #{tpu_custom_call.1}
  #allocation0 [shape = 'u32[]', space=smem, size = 0x4, offset = 0x4, fixed_abs, tag = 'smem constant byte address 0x4 - core index']
  #allocation1 [shape = 'u32[72,128]{1,0:T(1,128)}', space=vmem, size = 0x9000, scoped, tag = 'internal scratch']
  #allocation2 [shape = 'f32[8,128]{1,0:T(8,128)}', space=vmem, size = 0x1000, scoped, tag = 'scratch operand']
  #allocation3 [shape = 'f32[8,128]{1,0:T(8,128)}', space=vmem, size = 0x1000, scoped, tag = 'scratch operand']
  %s0 = inlined_call_operand.hbm [shape: f32[256,128], index: 0, kind: input, shape index: {}]
  %s1 = inlined_call_operand.hbm [shape: f32[2,2,128], index: 1, kind: output, shape index: {}]
  %s2 = sld [smem:[#allocation0]]
  $region49: #{tpu_custom_call.1} parent=0
    _
  %s4 = ssub.s32 1, %s2
  %s5 = scalar_select 0, %s4, %s2
  $region1: #{tpu_custom_call.1} parent=0
    #allocation4 [shape = 'u8[131072]{0}', space=vmem, size = 0x20000, scoped, tag = 'input window, operand 0']
    #allocation5 [shape = 's32[2]{0}', space=sflag, size = 0x8, scoped, tag = 'scoped memory for tpu_custom_call.1']
    #allocation6 [shape = 's32[2]{0}', space=sflag, size = 0x8, scoped, tag = 'scoped memory for tpu_custom_call.1']
    #allocation7 [shape = 'u8[2048]{0}', space=vmem, size = 0x800, scoped, tag = 'output window, operand 0']
    %6 = vsyncpa [#allocation5], 0
    %s7 = scalar_lea.sflag [#allocation5], 1
    %8 = vsyncpa %s7, 0
    %9 = vsyncpa [#allocation6], 0
    %s10 = scalar_lea.sflag [#allocation6], 1
    %11 = vsyncpa %s10, 0
    loop: start=0, step=1, limit=4
    $region2: #{tpu_custom_call.1} parent=1 // loop_pre_header
      _
    $region3: #{tpu_custom_call.1} parent=1 // loop_header
      %s13 = sphi 0, %s17
      %p14 = scmp.ge.s32.totalorder %s13, 4
      %s20 = sphi 0, %s32
      %s21 = sphi 0, %s28
      %s22 = sphi 0, %s20
      %s23 = sphi 0, %s21
      %s24 = sphi 0, %s22
      %s25 = sphi 0, %s23
      %s37 = sphi 0, %s39
      %s40 = sphi 0, %s37
      %s41 = sphi 0, %s40
      %s57 = sphi 0, %s41
      %s63 = sphi 0, %s65
      %s66 = sphi 0, %s63
      %s67 = sphi 0, %s66
      %s83 = sphi 0, %s67
    $region4: #{tpu_custom_call.1} parent=1 // loop_header_branch
      %16 = sbr.rel (%p14) target = $region8
    $region5: #{tpu_custom_call.1} parent=1 // loop_body
      %s18 = ssub.s32 %s13, 1
      %s19 = ssub.s32 %s13, 2
      %s26 = sadd.s32 1, %s21
      %p27 = scmp.ge.s32.totalorder %s26, 1
      %s28 = scalar_select %p27, 0, %s26
      %s29 = sadd.s32 1, %s20
      %s30 = scalar_select %p27, %s29, %s20
      %p31 = scmp.ge.s32.totalorder %s30, 2
      %s32 = scalar_select %p31, 0, %s30
      %s33 = sadd.s32 %s20, %s21
      %s34 = sadd.s32 %s32, %s28
      %s35 = ssub.s32 %s33, %s34
      %p36 = scmp.eq.s32.totalorder %s35, 0
      %s38 = sadd.s32 %s37, 1
      %s39 = scalar_select %p36, %s37, %s38
      %p42 = pneg %p36
      %p43 = scmp.eq.s32.totalorder %s13, 1
      %p44 = por %p42, %p43
      %p45 = scmp.ne.s32.totalorder %s37, %s40
      %p46 = scmp.eq.s32.totalorder %s13, 0
      %p47 = por %p45, %p46
      %p48 = scmp.ne.s32.totalorder %s37, %s40
      %p49 = scmp.eq.s32.totalorder %s18, 1
      %p50 = por %p48, %p49
      %p51 = scmp.ne.s32.totalorder %s40, %s41
      %p52 = scmp.eq.s32.totalorder %s18, 0
      %p53 = por %p51, %p52
      %p54 = scmp.ne.s32.totalorder %s40, %s41
      %p55 = scmp.eq.s32.totalorder %s19, 1
      %p56 = por %p54, %p55
      %p58 = scmp.ne.s32.totalorder %s41, %s57
      %p59 = scmp.eq.s32.totalorder %s19, 0
      %p60 = por %p58, %p59
      %s61 = ssub.s32 %s20, %s32
      %p62 = scmp.eq.s32.totalorder %s61, 0
      %s64 = sadd.s32 %s63, 1
      %s65 = scalar_select %p62, %s63, %s64
      %p68 = pneg %p62
      %p69 = scmp.eq.s32.totalorder %s13, 1
      %p70 = por %p68, %p69
      %p71 = scmp.ne.s32.totalorder %s63, %s66
      %p72 = scmp.eq.s32.totalorder %s13, 0
      %p73 = por %p71, %p72
      %p74 = scmp.ne.s32.totalorder %s63, %s66
      %p75 = scmp.eq.s32.totalorder %s18, 1
      %p76 = por %p74, %p75
      %p77 = scmp.ne.s32.totalorder %s66, %s67
      %p78 = scmp.eq.s32.totalorder %s18, 0
      %p79 = por %p77, %p78
      %p80 = scmp.ne.s32.totalorder %s66, %s67
      %p81 = scmp.eq.s32.totalorder %s19, 1
      %p82 = por %p80, %p81
      %p84 = scmp.ne.s32.totalorder %s67, %s83
      %p85 = scmp.eq.s32.totalorder %s19, 0
      %p86 = por %p84, %p85
      %p87 = scmp.le.s32.totalorder 1, %s13
      %p88 = scmp.lt.s32.totalorder %s13, 3
      %p89 = pnand %p87, %p88
      %p90 = pneg %p89
      // Predicated region
      $region9: #{tpu_custom_call.1} parent=5 // pred_check
        _
      $region10: #{tpu_custom_call.1} parent=5 // pred_check_branch
        %92 = sbr.rel (%p89) target = $region12
      $region11: #{tpu_custom_call.1} parent=5 // pred_region
        %s93 = ssub.s32 %s13, 1
      $region12: #{tpu_custom_call.1} parent=5 // pred_fallthru
        _
      %p94 = scmp.lt.s32.totalorder %s13, 2
      // Predicated region
      $region13: #{tpu_custom_call.1} parent=5 // pred_check
        %p95 = pneg %p94
      $region14: #{tpu_custom_call.1} parent=5 // pred_check_branch
        %97 = sbr.rel (%p95) target = $region16
      $region15: #{tpu_custom_call.1} parent=5 // pred_region
        // Predicated region
        $region17: #{tpu_custom_call.1} parent=15 // pred_check
          %p98 = pneg %p47
        $region18: #{tpu_custom_call.1} parent=15 // pred_check_branch
          %100 = sbr.rel (%p98) target = $region20
        $region19: #{tpu_custom_call.1} parent=15 // pred_region
          %s101 = sand.u32 %s37, 1
          %s102 = scalar_lea.sflag [#allocation5], %s101
          %s103 = sand.u32 %s37, 1
          %s104 = smul.addr %s103, 128
          %s105 = scalar_lea.vmem [#allocation4], %s104
          %s106 = sadd.s32 %s20, %s21
          %s107 = smul.u32 16, %s106
          %109 = vsyncadd %s102, 0
          %s110 = smul.addr %s107, 8
          %s111 = scalar_lea.hbm %s0, %s110
          %s112 = sshll.u32 %s111, 4
          %s113 = int_to_ptr.hbm [resolvable:$true] %s112
          %s114 = sshll.u32 %s105, 4
          %s115 = int_to_ptr.vmem [resolvable:$true] %s114
          %120 = dma.hbm_to_vmem [thread:$0]  %s113, 2048, %s115, %s102, 128, 128, 8
        $region20: #{tpu_custom_call.1} parent=15 // pred_fallthru
          _
      $region16: #{tpu_custom_call.1} parent=5 // pred_fallthru
        _
      %p121 = scmp.le.s32.totalorder 1, %s13
      %p122 = scmp.lt.s32.totalorder %s13, 3
      %p123 = pnand %p121, %p122
      %p124 = pneg %p123
      // Predicated region
      $region21: #{tpu_custom_call.1} parent=5 // pred_check
        _
      $region22: #{tpu_custom_call.1} parent=5 // pred_check_branch
        %126 = sbr.rel (%p123) target = $region24
      $region23: #{tpu_custom_call.1} parent=5 // pred_region
        %s127 = ssub.s32 %s13, 1
        %s128 = sand.u32 %s40, 1
        %s129 = scalar_lea.sflag [#allocation5], %s128
        %s130 = sand.u32 %s40, 1
        %s131 = smul.addr %s130, 128
        %s132 = scalar_lea.vmem [#allocation4], %s131
        // Predicated region
        $region25: #{tpu_custom_call.1} parent=23 // pred_check
          %p133 = pneg %p53
        $region26: #{tpu_custom_call.1} parent=23 // pred_check_branch
          %135 = sbr.rel (%p133) target = $region28
        $region27: #{tpu_custom_call.1} parent=23 // pred_region
          %137 = dma.done %s129, 2048
        $region28: #{tpu_custom_call.1} parent=23 // pred_fallthru
          _
        %s138 = sand.u32 %s40, 1
        %s139 = scalar_lea.sflag [#allocation5], %s138
        %s140 = sand.u32 %s40, 1
        %s141 = smul.addr %s140, 128
        %s142 = scalar_lea.vmem [#allocation4], %s141
        %p143 = pneg %p53
        %p144 = pneg %p50
        %p145 = pneg %p79
        %p146 = pneg %p76
        %s147 = sand.u32 %s66, 1
        %s148 = scalar_lea.sflag [#allocation6], %s147
        %s149 = sand.u32 %s66, 1
        %s150 = smul.addr %s149, 2
        %s151 = scalar_lea.vmem [#allocation7], %s150
        %s152 = sadd.s32 %s22, %s23
        %s153 = smul.u32 16, %s152
        %p154 = scmp.eq.s32.totalorder %s23, 0
        // Predicated region
        $region29: #{tpu_custom_call.1} parent=23 // pred_check
          %p155 = pneg %p154
        $region30: #{tpu_custom_call.1} parent=23 // pred_check_branch
          %157 = sbr.rel (%p155) target = $region32
        $region31: #{tpu_custom_call.1} parent=23 // pred_region
          %158 = vst [vmem:[#allocation2] sm:$0xff] 0.0
          %159 = vst [vmem:[#allocation3] sm:$0xff] 0.0
        $region32: #{tpu_custom_call.1} parent=23 // pred_fallthru
          _
        %v160 = vld [vmem:[%s132] sm:$0xff]
        %v161 = vld [vmem:[%s132 + $0x8] sm:$0xff]
        %v162 = vld [vmem:[%s132 + $0x10] sm:$0xff]
        %v163 = vld [vmem:[%s132 + $0x18] sm:$0xff]
        %v164 = vld [vmem:[%s132 + $0x20] sm:$0xff]
        %v165 = vld [vmem:[%s132 + $0x28] sm:$0xff]
        %v166 = vld [vmem:[%s132 + $0x30] sm:$0xff]
        %v167 = vld [vmem:[%s132 + $0x38] sm:$0xff]
        %v168 = vld [vmem:[%s132 + $0x40] sm:$0xff]
        %v169 = vld [vmem:[%s132 + $0x48] sm:$0xff]
        %v170 = vld [vmem:[%s132 + $0x50] sm:$0xff]
        %v171 = vld [vmem:[%s132 + $0x58] sm:$0xff]
        %v172 = vld [vmem:[%s132 + $0x60] sm:$0xff]
        %v173 = vld [vmem:[%s132 + $0x68] sm:$0xff]
        %v174 = vld [vmem:[%s132 + $0x70] sm:$0xff]
        %v175 = vld [vmem:[%s132 + $0x78] sm:$0xff]
        %v176 = vld [vmem:[#allocation2] sm:$0xff]
        %v177 = vadd.f32 %v160, %v161
        %v178 = vadd.f32 %v177, %v162
        %v179 = vadd.f32 %v178, %v163
        %v180 = vadd.f32 %v179, %v164
        %v181 = vadd.f32 %v180, %v165
        %v182 = vadd.f32 %v181, %v166
        %v183 = vadd.f32 %v182, %v167
        %v184 = vadd.f32 %v183, %v168
        %v185 = vadd.f32 %v184, %v169
        %v186 = vadd.f32 %v185, %v170
        %v187 = vadd.f32 %v186, %v171
        %v188 = vadd.f32 %v187, %v172
        %v189 = vadd.f32 %v188, %v173
        %v190 = vadd.f32 %v189, %v174
        %v191 = vadd.f32 %v190, %v175
        %v192 = vadd.f32 %v176, %v191
        %193 = vst [vmem:[#allocation2] sm:$0xff] %v192
        %v194 = vld [vmem:[#allocation3] sm:$0xff]
        %v195 = vmul.f32 %v160, %v160
        %v196 = vmul.f32 %v161, %v161
        %v197 = vmul.f32 %v162, %v162
        %v198 = vmul.f32 %v163, %v163
        %v199 = vmul.f32 %v164, %v164
        %v200 = vmul.f32 %v165, %v165
        %v201 = vmul.f32 %v166, %v166
        %v202 = vmul.f32 %v167, %v167
        %v203 = vmul.f32 %v168, %v168
        %v204 = vmul.f32 %v169, %v169
        %v205 = vmul.f32 %v170, %v170
        %v206 = vmul.f32 %v171, %v171
        %v207 = vmul.f32 %v172, %v172
        %v208 = vmul.f32 %v173, %v173
        %v209 = vmul.f32 %v174, %v174
        %v210 = vmul.f32 %v175, %v175
        %v211 = vadd.f32 %v195, %v196
        %v212 = vadd.f32 %v211, %v197
        %v213 = vadd.f32 %v212, %v198
        %v214 = vadd.f32 %v213, %v199
        %v215 = vadd.f32 %v214, %v200
        %v216 = vadd.f32 %v215, %v201
        %v217 = vadd.f32 %v216, %v202
        %v218 = vadd.f32 %v217, %v203
        %v219 = vadd.f32 %v218, %v204
        %v220 = vadd.f32 %v219, %v205
        %v221 = vadd.f32 %v220, %v206
        %v222 = vadd.f32 %v221, %v207
        %v223 = vadd.f32 %v222, %v208
        %v224 = vadd.f32 %v223, %v209
        %v225 = vadd.f32 %v224, %v210
        %v226 = vadd.f32 %v194, %v225
        %227 = vst [vmem:[#allocation3] sm:$0xff] %v226
        // Predicated region
        $region33: #{tpu_custom_call.1} parent=23 // pred_check
          %p228 = pneg %p154
        $region34: #{tpu_custom_call.1} parent=23 // pred_check_branch
          %230 = sbr.rel (%p228) target = $region36
        $region35: #{tpu_custom_call.1} parent=23 // pred_region
          %v231 = vld [vmem:[#allocation2] sm:$0xff]
          %v232 = vrot.slane %v231, 4
          %v233 = vadd.f32 %v231, %v232
          %v234 = vrot.slane %v233, 2
          %v235 = vadd.f32 %v233, %v234
          %v236 = vrot.slane %v235, 1
          %v237 = vadd.f32 %v235, %v236
          %v238 = vld [vmem:[#allocation3] sm:$0xff]
          %v239 = vrot.slane %v238, 4
          %v240 = vadd.f32 %v238, %v239
          %v241 = vrot.slane %v240, 2
          %v242 = vadd.f32 %v240, %v241
          %v243 = vrot.slane %v242, 1
          %v244 = vadd.f32 %v242, %v243
          %vm245 = vcmask 1040384
          %v246 = vsel %vm245, %v237, %v244
          %247 = vst [vmem:[%s151] sm:$0x3] %v246
        $region36: #{tpu_custom_call.1} parent=23 // pred_fallthru
          _
        %s248 = sand.u32 %s66, 1
        %s249 = scalar_lea.sflag [#allocation6], %s248
        %s250 = sand.u32 %s66, 1
        %s251 = smul.addr %s250, 2
        %s252 = scalar_lea.vmem [#allocation7], %s251
        // Predicated region
        $region37: #{tpu_custom_call.1} parent=23 // pred_check
          %p253 = pneg %p76
        $region38: #{tpu_custom_call.1} parent=23 // pred_check_branch
          %255 = sbr.rel (%p253) target = $region40
        $region39: #{tpu_custom_call.1} parent=23 // pred_region
          %257 = vsyncadd %s249, 0
          %s258 = smul.addr %s22, 2
          %s259 = scalar_lea.hbm %s1, %s258
          %s261 = sshll.u32 %s252, 4
          %s262 = int_to_ptr.vmem [resolvable:$true] %s261
          %s263 = sshll.u32 %s259, 4
          %s264 = int_to_ptr.hbm [resolvable:$true] %s263
          %266 = dma.vmem_to_hbm [thread:$0]  %s262, 32, %s264, %s249
        $region40: #{tpu_custom_call.1} parent=23 // pred_fallthru
          _
      $region24: #{tpu_custom_call.1} parent=5 // pred_fallthru
        _
      %p267 = scmp.le.s32.totalorder 2, %s13
      // Predicated region
      $region41: #{tpu_custom_call.1} parent=5 // pred_check
        %p268 = pneg %p267
      $region42: #{tpu_custom_call.1} parent=5 // pred_check_branch
        %270 = sbr.rel (%p268) target = $region44
      $region43: #{tpu_custom_call.1} parent=5 // pred_region
        %s271 = ssub.s32 %s13, 2
        // Predicated region
        $region45: #{tpu_custom_call.1} parent=43 // pred_check
          %p272 = pneg %p82
        $region46: #{tpu_custom_call.1} parent=43 // pred_check_branch
          %274 = sbr.rel (%p272) target = $region48
        $region47: #{tpu_custom_call.1} parent=43 // pred_region
          %s275 = sand.u32 %s67, 1
          %s276 = scalar_lea.sflag [#allocation6], %s275
          %s277 = sand.u32 %s67, 1
          %s278 = smul.addr %s277, 2
          %s279 = scalar_lea.vmem [#allocation7], %s278
          %281 = dma.done %s276, 32
        $region48: #{tpu_custom_call.1} parent=43 // pred_fallthru
          _
      $region44: #{tpu_custom_call.1} parent=5 // pred_fallthru
        _
    $region6: #{tpu_custom_call.1} parent=1 // loop_footer
      %s17 = sadd.s32 1, %s13
    $region7: #{tpu_custom_call.1} parent=1 // loop_footer_branch
      %12 = sbr.rel target = $region3
    $region8: #{tpu_custom_call.1} parent=1 // loop_exit
      _
    %282 = vsyncpa [#allocation5], 1
    %s283 = scalar_lea.sflag [#allocation5], 1
    %284 = vsyncpa %s283, 1
    %285 = vsyncpa [#allocation6], 1
    %s286 = scalar_lea.sflag [#allocation6], 1
    %287 = vsyncpa %s286, 1

</llo_original>
